<compile_context>
chip_gen: v7x
topology: tpu7x:2x2x1
jax: 0.10.0
libtpu: 0.0.40
codegen_flags: <defaults>
</compile_context>

<pallas_src>
import numpy as np
import jax
import jax.numpy as jnp
from jax.experimental import pallas as pl
from jax.experimental.pallas import tpu as pltpu


def _round_up(x, m):
    return ((x + m - 1) // m) * m


def _choose_batch_tile(batch):
    # Small batches: a single batch-sized tile (one grid step).
    if batch <= 512:
        return _round_up(batch, 8)
    # Medium batches: exactly two grid steps -> both TensorCores on v7x.
    if batch <= 2048:
        return _round_up(pl.cdiv(batch, 2), 128)
    # Large batches: 1024-row tiles amortize per-step pipeline overhead
    # while keeping the double-buffered footprint well under VMEM limits.
    return 1024


def mscn_fcn_kernel(x_ref, w1_ref, b1_ref, w2_ref, b2_ref,
                    msk_ref, expand_ref, s1_ref, bm1_ref,
                    wm2_ref, bm2_ref, out_ref):
    # Stage 1: all per-table 2-layer MLPs fused as two block-diagonal matmuls.
    h = jnp.dot(x_ref[...], w1_ref[...],
                preferred_element_type=jnp.float32) + b1_ref[...]
    h = jnp.maximum(h, 0.0)                                    # (tb, thid_pad)
    h = jnp.dot(h.astype(w2_ref.dtype), w2_ref[...],
                preferred_element_type=jnp.float32) + b2_ref[...]
    h = jnp.maximum(h, 0.0)                                    # (tb, thid_pad)

    # Stage 2: expand the row-normalized masks (batch, T_pad) to lane width
    # with a tiny constant 0/1 matmul, then apply them (multiply is exact for
    # {0,1} masks and already carries the 1/masks.sum(1) normalization).
    mask_rep = jnp.dot(msk_ref[...], expand_ref[...],
                       preferred_element_type=jnp.float32)     # (tb, thid_pad)
    hm = h * mask_rep

    # Stage 3: table-sum + out_mlp1 folded into one matmul (S1 = summat @ Wm1).
    hid_a = jnp.dot(hm.astype(s1_ref.dtype), s1_ref[...],
                    preferred_element_type=jnp.float32) + bm1_ref[...]
    hid_a = jnp.maximum(hid_a, 0.0)                            # (tb, hid)

    # Stage 4: final projection produced directly as a lane-dense (1, tb) row:
    # contract the hidden dim of Wm2^T (1, hid) with the hidden dim of hid_a.
    logit = jax.lax.dot_general(
        wm2_ref[...], hid_a,
        dimension_numbers=(((1,), (1,)), ((), ())),
        preferred_element_type=jnp.float32) + bm2_ref[...]     # (1, tb)
    out_ref[...] = jax.nn.sigmoid(logit).reshape(out_ref.shape)


def pack_params(feature_sizes, hid_units, w1_list, b1_list, w2_list, b2_list,
                wm1, bm1, wm2, bm2, compute_dtype=jnp.float32):
    """Pack per-table FCN weights block-diagonally; zero padding is exact."""
    num_tables = len(feature_sizes)
    total_feat = sum(feature_sizes)
    thid = num_tables * hid_units
    thid_pad = _round_up(thid, 128)          # full 128-lane intermediates
    t_pad = _round_up(num_tables, 8)         # sublane-aligned mask columns

    w1_bd = np.zeros((total_feat, thid_pad), np.float32)
    b1_cat = np.zeros((1, thid_pad), np.float32)
    w2_bd = np.zeros((thid_pad, thid_pad), np.float32)
    b2_cat = np.zeros((1, thid_pad), np.float32)
    expand = np.zeros((t_pad, thid_pad), np.float32)
    start = 0
    for i, fs in enumerate(feature_sizes):
        c0 = i * hid_units
        w1_bd[start:start + fs, c0:c0 + hid_units] = np.asarray(w1_list[i])
        b1_cat[0, c0:c0 + hid_units] = np.asarray(b1_list[i])
        w2_bd[c0:c0 + hid_units, c0:c0 + hid_units] = np.asarray(w2_list[i])
        b2_cat[0, c0:c0 + hid_units] = np.asarray(b2_list[i])
        expand[i, c0:c0 + hid_units] = 1.0
        start += fs

    # Fold the stacked-identity table-sum into out_mlp1: S1 = summat @ Wm1.
    summat = np.tile(np.eye(hid_units, dtype=np.float32), (num_tables, 1))
    s1 = np.zeros((thid_pad, hid_units), np.float32)
    s1[:thid, :] = summat @ np.asarray(wm1, np.float32)

    wm2_row = np.asarray(wm2, np.float32).reshape(1, hid_units)   # (hid,1) -> (1,hid)
    bm2_val = np.asarray(bm2, np.float32).reshape(1, 1)
    bm1_row = np.asarray(bm1, np.float32).reshape(1, hid_units)

    return {
        'w1': jnp.asarray(w1_bd, compute_dtype),
        'b1': jnp.asarray(b1_cat),
        'w2': jnp.asarray(w2_bd, compute_dtype),
        'b2': jnp.asarray(b2_cat),
        'expand': jnp.asarray(expand),
        's1': jnp.asarray(s1, compute_dtype),
        'bm1': jnp.asarray(bm1_row),
        'wm2': jnp.asarray(wm2_row),
        'bm2': jnp.asarray(bm2_val),
        'hid_units': hid_units,
        'thid_pad': thid_pad,
        't_pad': t_pad,
        'total_feat': total_feat,
        'num_tables': num_tables,
        'compute_dtype': compute_dtype,
    }


def mscn_fcn_forward(features, masks, p):
    batch, total_feat = features.shape
    num_tables = masks.shape[1]
    hid = p['hid_units']
    thid_pad = p['thid_pad']
    t_pad = p['t_pad']
    cdt = p['compute_dtype']

    # Fold the per-row normalization into the masks themselves.
    # NOTE: rows with masks.sum()==0 give NaN — same divide-by-zero behaviour
    # as the PyTorch module.
    masks_f = masks.astype(jnp.float32)
    masks_scaled = masks_f / jnp.sum(masks_f, axis=1, keepdims=True)
    if t_pad != num_tables:
        masks_scaled = jnp.pad(masks_scaled, ((0, 0), (0, t_pad - num_tables)))

    tb = _choose_batch_tile(batch)
    pb = _round_up(batch, tb)
    feats = features.astype(cdt)
    if pb != batch:
        feats = jnp.pad(feats, ((0, pb - batch), (0, 0)))
        masks_scaled = jnp.pad(masks_scaled, ((0, pb - batch), (0, 0)))
    grid_b = pb // tb

    operands = (feats, p['w1'], p['b1'], p['w2'], p['b2'], masks_scaled,
                p['expand'], p['s1'], p['bm1'], p['wm2'], p['bm2'])

    def _nbytes(a):
        return int(a.size) * a.dtype.itemsize

    cost = pl.CostEstimate(
        flops=2 * pb * (total_feat * thid_pad + thid_pad * thid_pad
                        + t_pad * thid_pad + thid_pad * hid + hid),
        transcendentals=pb,
        bytes_accessed=sum(_nbytes(a) for a in operands) + 4 * pb,
    )

    out = pl.pallas_call(
        mscn_fcn_kernel,
        out_shape=jax.ShapeDtypeStruct((grid_b, 1, tb), jnp.float32),
        grid=(grid_b,),
        in_specs=[
            pl.BlockSpec((tb, total_feat), lambda b: (b, 0)),        # features
            pl.BlockSpec((total_feat, thid_pad), lambda b: (0, 0)),  # W1 block-diag
            pl.BlockSpec((1, thid_pad), lambda b: (0, 0)),           # b1 concat
            pl.BlockSpec((thid_pad, thid_pad), lambda b: (0, 0)),    # W2 block-diag
            pl.BlockSpec((1, thid_pad), lambda b: (0, 0)),           # b2 concat
            pl.BlockSpec((tb, t_pad), lambda b: (b, 0)),             # masks / masks.sum
            pl.BlockSpec((t_pad, thid_pad), lambda b: (0, 0)),       # 0/1 mask expander
            pl.BlockSpec((thid_pad, hid), lambda b: (0, 0)),         # S1 = summat @ Wm1
            pl.BlockSpec((1, hid), lambda b: (0, 0)),                # bm1
            pl.BlockSpec((1, hid), lambda b: (0, 0)),                # Wm2^T row
            pl.BlockSpec((1, 1), lambda b: (0, 0)),                  # bm2
        ],
        out_specs=pl.BlockSpec((1, 1, tb), lambda b: (b, 0, 0)),     # lane-dense row
        compiler_params=pltpu.CompilerParams(
            dimension_semantics=("parallel",),
            vmem_limit_bytes=32 * 1024 * 1024),
        cost_estimate=cost,
    )(*operands)

    return out.reshape(pb, 1)[:batch]


def reference_forward(features, masks, feature_sizes, w1_list, b1_list,
                      w2_list, b2_list, wm1, bm1, wm2, bm2):
    """Pure-JAX re-implementation of the PyTorch forward (for validation)."""
    batch = features.shape[0]
    hid = wm1.shape[0]
    acc = jnp.zeros((batch, hid), jnp.float32)
    start = 0
    for i, fs in enumerate(feature_sizes):
        xi = features[:, start:start + fs]
        h = jax.nn.relu(xi @ w1_list[i] + b1_list[i])
        h = jax.nn.relu(h @ w2_list[i] + b2_list[i])
        acc = acc + jnp.where(masks[:, i:i + 1] == 1.0, h, 0.0)
        start += fs
    norm = jnp.sum(masks, axis=1, keepdims=True)
    fcn = acc / norm
    hid_a = jax.nn.relu(fcn @ wm1 + bm1)
    return jax.nn.sigmoid(hid_a @ wm2 + bm2)


if __name__ == "__main__":
    # Small synthetic config consistent with the module.
    feature_sizes = [6, 10, 8]
    num_tables = len(feature_sizes)
    hid_units = 32
    batch = 10                      # non-multiple-of-8 -> exercises batch padding
    total_feat = sum(feature_sizes)

    key = jax.random.PRNGKey(0)
    keys = jax.random.split(key, 16)

    # Inputs.
    features = jax.random.normal(keys[0], (batch, total_feat), jnp.float32)
    masks = (jax.random.uniform(keys[1], (batch, num_tables)) > 0.4).astype(jnp.float32)
    masks = masks.at[:, 0].set(1.0)  # guarantee at least one active table per row

    # Deterministic synthetic parameters (per-table FCNs).
    w1_list, b1_list, w2_list, b2_list = [], [], [], []
    for i, fs in enumerate(feature_sizes):
        kw = jax.random.split(keys[2 + i], 4)
        w1_list.append(0.1 * jax.random.normal(kw[0], (fs, hid_units), jnp.float32))
        b1_list.append(0.1 * jax.random.normal(kw[1], (hid_units,), jnp.float32))
        w2_list.append(0.1 * jax.random.normal(kw[2], (hid_units, hid_units), jnp.float32))
        b2_list.append(0.1 * jax.random.normal(kw[3], (hid_units,), jnp.float32))

    wm1 = 0.1 * jax.random.normal(keys[10], (hid_units, hid_units), jnp.float32)
    bm1 = 0.1 * jax.random.normal(keys[11], (hid_units,), jnp.float32)
    wm2 = 0.1 * jax.random.normal(keys[12], (hid_units, 1), jnp.float32)
    bm2 = 0.1 * jax.random.normal(keys[13], (1,), jnp.float32)

    # f32 end-to-end for the 1e-5 check; pass compute_dtype=jnp.bfloat16 for
    # production on v6e/v7x to halve matmul-input HBM bytes.
    packed = pack_params(feature_sizes, hid_units,
                         w1_list, b1_list, w2_list, b2_list,
                         wm1, bm1, wm2, bm2, compute_dtype=jnp.float32)

    out = mscn_fcn_forward(features, masks, packed)
    out = jax.block_until_ready(out)

    ref = reference_forward(features, masks, feature_sizes,
                            w1_list, b1_list, w2_list, b2_list,
                            wm1, bm1, wm2, bm2)
    ref = jax.block_until_ready(ref)

    assert out.shape == (batch, 1)
    np.testing.assert_allclose(np.asarray(out), np.asarray(ref), atol=1e-5, rtol=1e-5)
    print("KERNEL_OK")
</pallas_src>

<mosaic_0001>
module attributes {stable_mosaic.version = 11 : i64} {
  func.func @mscn_fcn_kernel(%arg0: i32, %arg1: memref<16x24xf32, #tpu.memory_space<vmem>>, %arg2: memref<24x128xf32, #tpu.memory_space<vmem>>, %arg3: memref<1x128xf32, #tpu.memory_space<vmem>>, %arg4: memref<128x128xf32, #tpu.memory_space<vmem>>, %arg5: memref<1x128xf32, #tpu.memory_space<vmem>>, %arg6: memref<16x8xf32, #tpu.memory_space<vmem>>, %arg7: memref<8x128xf32, #tpu.memory_space<vmem>>, %arg8: memref<128x32xf32, #tpu.memory_space<vmem>>, %arg9: memref<1x32xf32, #tpu.memory_space<vmem>>, %arg10: memref<1x32xf32, #tpu.memory_space<vmem>>, %arg11: memref<1x1xf32, #tpu.memory_space<vmem>>, %arg12: memref<1x1x16xf32, #tpu.memory_space<vmem>>) attributes {dimension_semantics = [#tpu.dimension_semantics<parallel>], iteration_bounds = array<i64: 1>, scalar_prefetch = 0 : i64, scratch_operands = 0 : i64, tpu.core_type = #tpu.core_type<tc>, window_params = [{transform_indices = @transform_0, window_bounds = array<i64: 16, 24>}, {pipeline_mode = #tpu.pipeline_mode<synchronous>, transform_indices = @transform_1, window_bounds = array<i64: 24, 128>}, {pipeline_mode = #tpu.pipeline_mode<synchronous>, transform_indices = @transform_2, window_bounds = array<i64: 1, 128>}, {pipeline_mode = #tpu.pipeline_mode<synchronous>, transform_indices = @transform_3, window_bounds = array<i64: 128, 128>}, {pipeline_mode = #tpu.pipeline_mode<synchronous>, transform_indices = @transform_4, window_bounds = array<i64: 1, 128>}, {transform_indices = @transform_5, window_bounds = array<i64: 16, 8>}, {pipeline_mode = #tpu.pipeline_mode<synchronous>, transform_indices = @transform_6, window_bounds = array<i64: 8, 128>}, {pipeline_mode = #tpu.pipeline_mode<synchronous>, transform_indices = @transform_7, window_bounds = array<i64: 128, 32>}, {pipeline_mode = #tpu.pipeline_mode<synchronous>, transform_indices = @transform_8, window_bounds = array<i64: 1, 32>}, {pipeline_mode = #tpu.pipeline_mode<synchronous>, transform_indices = @transform_9, window_bounds = array<i64: 1, 32>}, {pipeline_mode = #tpu.pipeline_mode<synchronous>, transform_indices = @transform_10, window_bounds = array<i64: 1, 1>}, {transform_indices = @transform_11, window_bounds = array<i64: 1, 1, 16>}]} {
    %c0 = arith.constant 0 : index
    %c0_0 = arith.constant 0 : index
    %0 = vector.load %arg1[%c0, %c0_0] : memref<16x24xf32, #tpu.memory_space<vmem>>, vector<16x24xf32>
    %c0_1 = arith.constant 0 : index
    %c0_2 = arith.constant 0 : index
    %1 = vector.load %arg2[%c0_1, %c0_2] : memref<24x128xf32, #tpu.memory_space<vmem>>, vector<24x128xf32>
    %cst = arith.constant dense<0.000000e+00> : vector<16x128xf32>
    %2 = tpu.matmul %0, %1, %cst {dimension_numbers = #tpu.dot_dimension_numbers<[1], [0], [0], [1], [0, 0, 1, 1], [], []>} : vector<16x24xf32>, vector<24x128xf32>, vector<16x128xf32> -> vector<16x128xf32>
    %c0_3 = arith.constant 0 : index
    %c0_4 = arith.constant 0 : index
    %3 = vector.load %arg3[%c0_3, %c0_4] : memref<1x128xf32, #tpu.memory_space<vmem>>, vector<1x128xf32>
    %4 = vector.broadcast %3 : vector<1x128xf32> to vector<16x128xf32>
    %5 = arith.addf %2, %4 : vector<16x128xf32>
    %cst_5 = arith.constant 0.000000e+00 : f32
    %6 = vector.broadcast %cst_5 : f32 to vector<16x128xf32>
    %7 = arith.maximumf %5, %6 : vector<16x128xf32>
    %c0_6 = arith.constant 0 : index
    %c0_7 = arith.constant 0 : index
    %8 = vector.load %arg4[%c0_6, %c0_7] : memref<128x128xf32, #tpu.memory_space<vmem>>, vector<128x128xf32>
    %cst_8 = arith.constant dense<0.000000e+00> : vector<16x128xf32>
    %9 = tpu.matmul %7, %8, %cst_8 {dimension_numbers = #tpu.dot_dimension_numbers<[1], [0], [0], [1], [0, 0, 1, 1], [], []>} : vector<16x128xf32>, vector<128x128xf32>, vector<16x128xf32> -> vector<16x128xf32>
    %c0_9 = arith.constant 0 : index
    %c0_10 = arith.constant 0 : index
    %10 = vector.load %arg5[%c0_9, %c0_10] : memref<1x128xf32, #tpu.memory_space<vmem>>, vector<1x128xf32>
    %11 = vector.broadcast %10 : vector<1x128xf32> to vector<16x128xf32>
    %12 = arith.addf %9, %11 : vector<16x128xf32>
    %cst_11 = arith.constant 0.000000e+00 : f32
    %13 = vector.broadcast %cst_11 : f32 to vector<16x128xf32>
    %14 = arith.maximumf %12, %13 : vector<16x128xf32>
    %c0_12 = arith.constant 0 : index
    %c0_13 = arith.constant 0 : index
    %15 = vector.load %arg6[%c0_12, %c0_13] : memref<16x8xf32, #tpu.memory_space<vmem>>, vector<16x8xf32>
    %c0_14 = arith.constant 0 : index
    %c0_15 = arith.constant 0 : index
    %16 = vector.load %arg7[%c0_14, %c0_15] : memref<8x128xf32, #tpu.memory_space<vmem>>, vector<8x128xf32>
    %cst_16 = arith.constant dense<0.000000e+00> : vector<16x128xf32>
    %17 = tpu.matmul %15, %16, %cst_16 {dimension_numbers = #tpu.dot_dimension_numbers<[1], [0], [0], [1], [0, 0, 1, 1], [], []>} : vector<16x8xf32>, vector<8x128xf32>, vector<16x128xf32> -> vector<16x128xf32>
    %18 = arith.mulf %14, %17 : vector<16x128xf32>
    %c0_17 = arith.constant 0 : index
    %c0_18 = arith.constant 0 : index
    %19 = vector.load %arg8[%c0_17, %c0_18] : memref<128x32xf32, #tpu.memory_space<vmem>>, vector<128x32xf32>
    %cst_19 = arith.constant dense<0.000000e+00> : vector<16x32xf32>
    %20 = tpu.matmul %18, %19, %cst_19 {dimension_numbers = #tpu.dot_dimension_numbers<[1], [0], [0], [1], [0, 0, 1, 1], [], []>} : vector<16x128xf32>, vector<128x32xf32>, vector<16x32xf32> -> vector<16x32xf32>
    %c0_20 = arith.constant 0 : index
    %c0_21 = arith.constant 0 : index
    %21 = vector.load %arg9[%c0_20, %c0_21] : memref<1x32xf32, #tpu.memory_space<vmem>>, vector<1x32xf32>
    %22 = vector.broadcast %21 : vector<1x32xf32> to vector<16x32xf32>
    %23 = arith.addf %20, %22 : vector<16x32xf32>
    %cst_22 = arith.constant 0.000000e+00 : f32
    %24 = vector.broadcast %cst_22 : f32 to vector<16x32xf32>
    %25 = arith.maximumf %23, %24 : vector<16x32xf32>
    %c0_23 = arith.constant 0 : index
    %c0_24 = arith.constant 0 : index
    %26 = vector.load %arg10[%c0_23, %c0_24] : memref<1x32xf32, #tpu.memory_space<vmem>>, vector<1x32xf32>
    %cst_25 = arith.constant dense<0.000000e+00> : vector<1x16xf32>
    %27 = tpu.matmul %26, %25, %cst_25 {dimension_numbers = #tpu.dot_dimension_numbers<[1], [1], [0], [0], [0, 0, 1, 0], [], []>} : vector<1x32xf32>, vector<16x32xf32>, vector<1x16xf32> -> vector<1x16xf32>
    %c0_26 = arith.constant 0 : index
    %c0_27 = arith.constant 0 : index
    %28 = vector.load %arg11[%c0_26, %c0_27] : memref<1x1xf32, #tpu.memory_space<vmem>>, vector<1x1xf32>
    %29 = vector.broadcast %28 : vector<1x1xf32> to vector<1x16xf32>
    %30 = arith.addf %27, %29 : vector<1x16xf32>
    %31 = arith.negf %30 : vector<1x16xf32>
    %32 = math.exp %31 : vector<1x16xf32>
    %cst_28 = arith.constant 1.000000e+00 : f32
    %33 = vector.broadcast %cst_28 : f32 to vector<1x16xf32>
    %34 = arith.addf %33, %32 : vector<1x16xf32>
    %35 = arith.divf %33, %34 : vector<1x16xf32>
    %36 = vector.shape_cast %35 : vector<1x16xf32> to vector<1x1x16xf32>
    %c0_29 = arith.constant 0 : index
    %c0_30 = arith.constant 0 : index
    %c0_31 = arith.constant 0 : index
    %37 = vector.load %arg12[%c0_29, %c0_30, %c0_31] : memref<1x1x16xf32, #tpu.memory_space<vmem>>, vector<1x1x16xf32>
    tpu.vector_store %arg12[%c0_29, %c0_30, %c0_31], %36 {strides = array<i32>} : memref<1x1x16xf32, #tpu.memory_space<vmem>>, vector<1x1x16xf32>,
    return
  }
  func.func @transform_0(%arg0: i32) -> (i32, i32) {
    %c0_i32 = arith.constant 0 : i32
    %c0_i32_0 = arith.constant 0 : i32
    return %arg0, %c0_i32 : i32, i32
  }
  func.func @transform_1(%arg0: i32) -> (i32, i32) {
    %c0_i32 = arith.constant 0 : i32
    %c0_i32_0 = arith.constant 0 : i32
    %c0_i32_1 = arith.constant 0 : i32
    return %c0_i32, %c0_i32_0 : i32, i32
  }
  func.func @transform_2(%arg0: i32) -> (i32, i32) {
    %c0_i32 = arith.constant 0 : i32
    %c0_i32_0 = arith.constant 0 : i32
    %c0_i32_1 = arith.constant 0 : i32
    return %c0_i32, %c0_i32_0 : i32, i32
  }
  func.func @transform_3(%arg0: i32) -> (i32, i32) {
    %c0_i32 = arith.constant 0 : i32
    %c0_i32_0 = arith.constant 0 : i32
    %c0_i32_1 = arith.constant 0 : i32
    return %c0_i32, %c0_i32_0 : i32, i32
  }
  func.func @transform_4(%arg0: i32) -> (i32, i32) {
    %c0_i32 = arith.constant 0 : i32
    %c0_i32_0 = arith.constant 0 : i32
    %c0_i32_1 = arith.constant 0 : i32
    return %c0_i32, %c0_i32_0 : i32, i32
  }
  func.func @transform_5(%arg0: i32) -> (i32, i32) {
    %c0_i32 = arith.constant 0 : i32
    %c0_i32_0 = arith.constant 0 : i32
    return %arg0, %c0_i32 : i32, i32
  }
  func.func @transform_6(%arg0: i32) -> (i32, i32) {
    %c0_i32 = arith.constant 0 : i32
    %c0_i32_0 = arith.constant 0 : i32
    %c0_i32_1 = arith.constant 0 : i32
    return %c0_i32, %c0_i32_0 : i32, i32
  }
  func.func @transform_7(%arg0: i32) -> (i32, i32) {
    %c0_i32 = arith.constant 0 : i32
    %c0_i32_0 = arith.constant 0 : i32
    %c0_i32_1 = arith.constant 0 : i32
    return %c0_i32, %c0_i32_0 : i32, i32
  }
  func.func @transform_8(%arg0: i32) -> (i32, i32) {
    %c0_i32 = arith.constant 0 : i32
    %c0_i32_0 = arith.constant 0 : i32
    %c0_i32_1 = arith.constant 0 : i32
    return %c0_i32, %c0_i32_0 : i32, i32
  }
  func.func @transform_9(%arg0: i32) -> (i32, i32) {
    %c0_i32 = arith.constant 0 : i32
    %c0_i32_0 = arith.constant 0 : i32
    %c0_i32_1 = arith.constant 0 : i32
    return %c0_i32, %c0_i32_0 : i32, i32
  }
  func.func @transform_10(%arg0: i32) -> (i32, i32) {
    %c0_i32 = arith.constant 0 : i32
    %c0_i32_0 = arith.constant 0 : i32
    %c0_i32_1 = arith.constant 0 : i32
    return %c0_i32, %c0_i32_0 : i32, i32
  }
  func.func @transform_11(%arg0: i32) -> (i32, i32, i32) {
    %c0_i32 = arith.constant 0 : i32
    %c0_i32_0 = arith.constant 0 : i32
    %c0_i32_1 = arith.constant 0 : i32
    return %arg0, %c0_i32, %c0_i32_0 : i32, i32, i32
  }
}

</mosaic_0001>

<llo_original>
// kernel: tpu_custom_call.1
$region0: #{tpu_custom_call.1}
  #allocation0 [shape = 'u32[]', space=smem, size = 0x4, offset = 0x4, fixed_abs, tag = 'smem constant byte address 0x4 - core index']
  #allocation1 [shape = 'u32[144,128]{1,0:T(1,128)}', space=vmem, size = 0x12000, scoped, tag = 'internal scratch']
  #allocation2 [shape = 'f32[1,1]{1,0:T(1,128)S(1)}', space=vmem, size = 0x200, scoped, tag = 'scoped memory for tpu_custom_call.1']
  %s0 = inlined_call_operand.vmem [shape: f32[16,24], index: 0, kind: input, shape index: {}]
  %s1 = inlined_call_operand.vmem [shape: f32[24,128], index: 1, kind: input, shape index: {}]
  %s2 = inlined_call_operand.vmem [shape: f32[1,128], index: 2, kind: input, shape index: {}]
  %s3 = inlined_call_operand.vmem [shape: f32[128,128], index: 3, kind: input, shape index: {}]
  %s4 = inlined_call_operand.vmem [shape: f32[1,128], index: 4, kind: input, shape index: {}]
  %s5 = inlined_call_operand.vmem [shape: f32[16,8], index: 5, kind: input, shape index: {}]
  %s6 = inlined_call_operand.vmem [shape: f32[8,128], index: 6, kind: input, shape index: {}]
  %s7 = inlined_call_operand.vmem [shape: f32[128,32], index: 7, kind: input, shape index: {}]
  %s8 = inlined_call_operand.vmem [shape: f32[1,32], index: 8, kind: input, shape index: {}]
  %s9 = inlined_call_operand.vmem [shape: f32[1,32], index: 9, kind: input, shape index: {}]
  %s10 = inlined_call_operand.<no memory space> [shape: f32[1,1], index: 10, kind: input, shape index: {}]
  %s11 = inlined_call_operand.hbm [shape: f32[1,1,16], index: 11, kind: output, shape index: {}]
  %s12 = sld [smem:[#allocation0]]
  $region54: #{tpu_custom_call.1} parent=0
    _
  %s14 = ssub.s32 1, %s12
  %s15 = scalar_select 0, %s14, %s12
  %v16 = vstv %s10
  %17 = vst [vmem:[#allocation2] sm:$0x1] %v16
  $region1: #{tpu_custom_call.1} parent=0
    #allocation3 [shape = 'u8[512]{0}', space=vmem, size = 0x400, scoped, tag = 'output window, operand 0, single buffered']
    #allocation4 [shape = 's32[1]{0}', space=sflag, size = 0x4, scoped, tag = 'scoped memory for tpu_custom_call.1']
    %18 = vsyncpa [#allocation4], 0
    // Predicated region
    $region2: #{tpu_custom_call.1} parent=1 // pred_check
      _
    $region3: #{tpu_custom_call.1} parent=1 // pred_check_branch
      %20 = sbr.rel (0) target = $region5
    $region4: #{tpu_custom_call.1} parent=1 // pred_region
      _
    $region5: #{tpu_custom_call.1} parent=1 // pred_fallthru
      _
    // Predicated region
    $region6: #{tpu_custom_call.1} parent=1 // pred_check
      _
    $region7: #{tpu_custom_call.1} parent=1 // pred_check_branch
      %22 = sbr.rel (0) target = $region9
    $region8: #{tpu_custom_call.1} parent=1 // pred_region
      _
    $region9: #{tpu_custom_call.1} parent=1 // pred_fallthru
      _
    // Predicated region
    $region10: #{tpu_custom_call.1} parent=1 // pred_check
      _
    $region11: #{tpu_custom_call.1} parent=1 // pred_check_branch
      %24 = sbr.rel (0) target = $region13
    $region12: #{tpu_custom_call.1} parent=1 // pred_region
      _
    $region13: #{tpu_custom_call.1} parent=1 // pred_fallthru
      _
    // Predicated region
    $region14: #{tpu_custom_call.1} parent=1 // pred_check
      _
    $region15: #{tpu_custom_call.1} parent=1 // pred_check_branch
      %26 = sbr.rel (0) target = $region17
    $region16: #{tpu_custom_call.1} parent=1 // pred_region
      _
    $region17: #{tpu_custom_call.1} parent=1 // pred_fallthru
      _
    // Predicated region
    $region18: #{tpu_custom_call.1} parent=1 // pred_check
      _
    $region19: #{tpu_custom_call.1} parent=1 // pred_check_branch
      %28 = sbr.rel (0) target = $region21
    $region20: #{tpu_custom_call.1} parent=1 // pred_region
      _
    $region21: #{tpu_custom_call.1} parent=1 // pred_fallthru
      _
    // Predicated region
    $region22: #{tpu_custom_call.1} parent=1 // pred_check
      _
    $region23: #{tpu_custom_call.1} parent=1 // pred_check_branch
      %30 = sbr.rel (0) target = $region25
    $region24: #{tpu_custom_call.1} parent=1 // pred_region
      _
    $region25: #{tpu_custom_call.1} parent=1 // pred_fallthru
      _
    // Predicated region
    $region26: #{tpu_custom_call.1} parent=1 // pred_check
      _
    $region27: #{tpu_custom_call.1} parent=1 // pred_check_branch
      %32 = sbr.rel (0) target = $region29
    $region28: #{tpu_custom_call.1} parent=1 // pred_region
      _
    $region29: #{tpu_custom_call.1} parent=1 // pred_fallthru
      _
    // Predicated region
    $region30: #{tpu_custom_call.1} parent=1 // pred_check
      _
    $region31: #{tpu_custom_call.1} parent=1 // pred_check_branch
      %34 = sbr.rel (0) target = $region33
    $region32: #{tpu_custom_call.1} parent=1 // pred_region
      _
    $region33: #{tpu_custom_call.1} parent=1 // pred_fallthru
      _
    // Predicated region
    $region34: #{tpu_custom_call.1} parent=1 // pred_check
      _
    $region35: #{tpu_custom_call.1} parent=1 // pred_check_branch
      %36 = sbr.rel (0) target = $region37
    $region36: #{tpu_custom_call.1} parent=1 // pred_region
      _
    $region37: #{tpu_custom_call.1} parent=1 // pred_fallthru
      _
    // Predicated region
    $region38: #{tpu_custom_call.1} parent=1 // pred_check
      _
    $region39: #{tpu_custom_call.1} parent=1 // pred_check_branch
      %38 = sbr.rel (0) target = $region41
    $region40: #{tpu_custom_call.1} parent=1 // pred_region
      _
    $region41: #{tpu_custom_call.1} parent=1 // pred_fallthru
      _
    // Predicated region
    $region42: #{tpu_custom_call.1} parent=1 // pred_check
      _
    $region43: #{tpu_custom_call.1} parent=1 // pred_check_branch
      %40 = sbr.rel (0) target = $region45
    $region44: #{tpu_custom_call.1} parent=1 // pred_region
      _
    $region45: #{tpu_custom_call.1} parent=1 // pred_fallthru
      _
    %v41 = vld [vmem:[%s0] sm:$0xff]
    %v42 = vld [vmem:[%s0 + $0x8] sm:$0xff]
    %v43 = vld [vmem:[%s1] sm:$0xff]
    %v44 = vld [vmem:[%s1 + $0x8] sm:$0xff]
    %v45 = vld [vmem:[%s1 + $0x10] sm:$0xff]
    %v46 = vld [vmem:[%s2] sm:$0x1]
    %v48 = vlaneseq
    %v49 = vshrl.u32 %v48, 7
    %v50 = vsub.s32 0, %v49
    %v51 = vrot.slane %v46, %v50
    %vm53 = vcmask 195584
    %v55 = vsel %vm53, %v41, 0
    %v58 = vsel %vm53, %v42, 0
    %60 = vmatprep.subr.mxu0 0.0
    %61 = vmatpush1.msra.mxu0 %v43
    %62 = vmatprep.subr.mxu0 0.0
    %63 = vmatpush1.msra.mxu0 %v44
    %64 = vmatprep.subr.mxu0 0.0
    %65 = vmatpush1.msra.mxu0 %v45
    %66 = vmatprep.subr.mxu0 0.0
    %67 = vmatpush1.msra.mxu0 0.0
    %68 = vmatprep.subr.mxu0 0.0
    %69 = vmatpush1.msra.mxu0 0.0
    %70 = vmatprep.subr.mxu0 0.0
    %71 = vmatpush1.msra.mxu0 0.0
    %72 = vmatprep.subr.mxu0 0.0
    %73 = vmatpush1.msra.mxu0 0.0
    %74 = vmatprep.subr.mxu0 0.0
    %75 = vmatpush1.msra.mxu0 0.0
    %76 = vmatprep.subr.mxu0 0.0
    %77 = vmatpush1.msra.mxu0 0.0
    %78 = vmatprep.subr.mxu0 0.0
    %79 = vmatpush1.msra.mxu0 0.0
    %80 = vmatprep.subr.mxu0 0.0
    %81 = vmatpush1.msra.mxu0 0.0
    %82 = vmatprep.subr.mxu0 0.0
    %83 = vmatpush1.msra.mxu0 0.0
    %84 = vmatprep.subr.mxu0 0.0
    %85 = vmatpush1.msra.mxu0 0.0
    %86 = vmatprep.subr.mxu0 0.0
    %87 = vmatpush1.msra.mxu0 0.0
    %88 = vmatprep.subr.mxu0 0.0
    %89 = vmatpush1.msra.mxu0 0.0
    %90 = vmatprep.subr.mxu0 0.0
    %91 = vmatpush1.msra.mxu0 0.0
    %92 = vmatprep.subr.mxu0 0.0
    %93 = vmatpush1.msra.mxu0 0.0
    %94 = vmatprep.subr.mxu0 0.0
    %95 = vmatpush1.msra.mxu0 0.0
    %96 = vmatprep.subr.mxu0 0.0
    %97 = vmatpush1.msra.mxu0 0.0
    %98 = vmatprep.subr.mxu0 0.0
    %99 = vmatpush1.msra.mxu0 0.0
    %100 = vmatprep.subr.mxu0 0.0
    %101 = vmatpush1.msra.mxu0 0.0
    %102 = vmatprep.subr.mxu0 0.0
    %103 = vmatpush1.msra.mxu0 0.0
    %104 = vmatprep.subr.mxu0 0.0
    %105 = vmatpush1.msra.mxu0 0.0
    %106 = vmatprep.subr.mxu0 0.0
    %107 = vmatpush1.msra.mxu0 0.0
    %108 = vmatprep.subr.mxu0 0.0
    %109 = vmatpush1.msra.mxu0 0.0
    %110 = vmatprep.subr.mxu0 0.0
    %111 = vmatpush1.msra.mxu0 0.0
    %112 = vmatprep.subr.mxu0 0.0
    %113 = vmatpush1.msra.mxu0 0.0
    %114 = vmatprep.subr.mxu0 0.0
    %115 = vmatpush1.msra.mxu0 0.0
    %116 = vmatprep.subr.mxu0 0.0
    %117 = vmatpush1.msra.mxu0 0.0
    %118 = vmatprep.subr.mxu0 0.0
    %119 = vmatpush1.msra.mxu0 0.0
    %120 = vmatprep.subr.mxu0 0.0
    %121 = vmatpush1.msra.mxu0 0.0
    %122 = vmatprep.subr.mxu0 0.0
    %123 = vmatpush1.msra.mxu0 0.0
    %124 = vmatprep.mubr.f32.mxu0 0.0
    %125 = vmatmul.mubr.f32.gmra.mrb[0].mxu0 %v55
    %v126 = vpop.f32.mrb[0].mxu0
    %v127 = vadd.f32 %v51, %v126
    %v128 = vpop.f32.mrb[0].mxu0
    %129 = vmatprep.mubr.f32.mxu0 0.0
    %130 = vmatmul.mubr.f32.gmra.mrb[0].mxu0 %v58
    %v131 = vpop.f32.mrb[0].mxu0
    %v132 = vadd.f32 %v51, %v131
    %v133 = vpop.f32.mrb[0].mxu0
    %134 = vdwg.mxu0
    %v135 = vmax.f32 %v127, 0.0
    %v136 = vmax.f32 %v132, 0.0
    %v137 = vld [vmem:[%s3] sm:$0xff]
    %v138 = vld [vmem:[%s3 + $0x8] sm:$0xff]
    %v139 = vld [vmem:[%s3 + $0x10] sm:$0xff]
    %v140 = vld [vmem:[%s3 + $0x18] sm:$0xff]
    %v141 = vld [vmem:[%s3 + $0x20] sm:$0xff]
    %v142 = vld [vmem:[%s3 + $0x28] sm:$0xff]
    %v143 = vld [vmem:[%s3 + $0x30] sm:$0xff]
    %v144 = vld [vmem:[%s3 + $0x38] sm:$0xff]
    %v145 = vld [vmem:[%s3 + $0x40] sm:$0xff]
    %v146 = vld [vmem:[%s3 + $0x48] sm:$0xff]
    %v147 = vld [vmem:[%s3 + $0x50] sm:$0xff]
    %v148 = vld [vmem:[%s3 + $0x58] sm:$0xff]
    %v149 = vld [vmem:[%s3 + $0x60] sm:$0xff]
    %v150 = vld [vmem:[%s3 + $0x68] sm:$0xff]
    %v151 = vld [vmem:[%s3 + $0x70] sm:$0xff]
    %v152 = vld [vmem:[%s3 + $0x78] sm:$0xff]
    %v153 = vld [vmem:[%s4] sm:$0x1]
    %v155 = vlaneseq
    %v156 = vshrl.u32 %v155, 7
    %v157 = vsub.s32 0, %v156
    %v158 = vrot.slane %v153, %v157
    %160 = vmatprep.subr.mxu0 0.0
    %161 = vmatpush1.msra.mxu0 %v137
    %162 = vmatprep.subr.mxu0 0.0
    %163 = vmatpush1.msra.mxu0 %v138
    %164 = vmatprep.subr.mxu0 0.0
    %165 = vmatpush1.msra.mxu0 %v139
    %166 = vmatprep.subr.mxu0 0.0
    %167 = vmatpush1.msra.mxu0 %v140
    %168 = vmatprep.subr.mxu0 0.0
    %169 = vmatpush1.msra.mxu0 %v141
    %170 = vmatprep.subr.mxu0 0.0
    %171 = vmatpush1.msra.mxu0 %v142
    %172 = vmatprep.subr.mxu0 0.0
    %173 = vmatpush1.msra.mxu0 %v143
    %174 = vmatprep.subr.mxu0 0.0
    %175 = vmatpush1.msra.mxu0 %v144
    %176 = vmatprep.subr.mxu0 0.0
    %177 = vmatpush1.msra.mxu0 %v145
    %178 = vmatprep.subr.mxu0 0.0
    %179 = vmatpush1.msra.mxu0 %v146
    %180 = vmatprep.subr.mxu0 0.0
    %181 = vmatpush1.msra.mxu0 %v147
    %182 = vmatprep.subr.mxu0 0.0
    %183 = vmatpush1.msra.mxu0 %v148
    %184 = vmatprep.subr.mxu0 0.0
    %185 = vmatpush1.msra.mxu0 %v149
    %186 = vmatprep.subr.mxu0 0.0
    %187 = vmatpush1.msra.mxu0 %v150
    %188 = vmatprep.subr.mxu0 0.0
    %189 = vmatpush1.msra.mxu0 %v151
    %190 = vmatprep.subr.mxu0 0.0
    %191 = vmatpush1.msra.mxu0 %v152
    %192 = vmatprep.subr.mxu0 0.0
    %193 = vmatpush1.msra.mxu0 0.0
    %194 = vmatprep.subr.mxu0 0.0
    %195 = vmatpush1.msra.mxu0 0.0
    %196 = vmatprep.subr.mxu0 0.0
    %197 = vmatpush1.msra.mxu0 0.0
    %198 = vmatprep.subr.mxu0 0.0
    %199 = vmatpush1.msra.mxu0 0.0
    %200 = vmatprep.subr.mxu0 0.0
    %201 = vmatpush1.msra.mxu0 0.0
    %202 = vmatprep.subr.mxu0 0.0
    %203 = vmatpush1.msra.mxu0 0.0
    %204 = vmatprep.subr.mxu0 0.0
    %205 = vmatpush1.msra.mxu0 0.0
    %206 = vmatprep.subr.mxu0 0.0
    %207 = vmatpush1.msra.mxu0 0.0
    %208 = vmatprep.subr.mxu0 0.0
    %209 = vmatpush1.msra.mxu0 0.0
    %210 = vmatprep.subr.mxu0 0.0
    %211 = vmatpush1.msra.mxu0 0.0
    %212 = vmatprep.subr.mxu0 0.0
    %213 = vmatpush1.msra.mxu0 0.0
    %214 = vmatprep.subr.mxu0 0.0
    %215 = vmatpush1.msra.mxu0 0.0
    %216 = vmatprep.subr.mxu0 0.0
    %217 = vmatpush1.msra.mxu0 0.0
    %218 = vmatprep.subr.mxu0 0.0
    %219 = vmatpush1.msra.mxu0 0.0
    %220 = vmatprep.subr.mxu0 0.0
    %221 = vmatpush1.msra.mxu0 0.0
    %222 = vmatprep.subr.mxu0 0.0
    %223 = vmatpush1.msra.mxu0 0.0
    %224 = vmatprep.mubr.f32.mxu0 0.0
    %225 = vmatmul.mubr.f32.gmra.mrb[0].mxu0 %v135
    %v226 = vpop.f32.mrb[0].mxu0
    %v227 = vadd.f32 %v158, %v226
    %v228 = vpop.f32.mrb[0].mxu0
    %229 = vmatprep.mubr.f32.mxu0 0.0
    %230 = vmatmul.mubr.f32.gmra.mrb[0].mxu0 %v136
    %v231 = vpop.f32.mrb[0].mxu0
    %v232 = vadd.f32 %v158, %v231
    %v233 = vpop.f32.mrb[0].mxu0
    %234 = vdwg.mxu0
    %v235 = vmax.f32 %v227, 0.0
    %v236 = vmax.f32 %v232, 0.0
    %v237 = vld [vmem:[%s5] sm:$0xff]
    %v238 = vld [vmem:[%s5 + $0x8] sm:$0xff]
    %v239 = vld [vmem:[%s6] sm:$0xff]
    %vm240 = vcmask 64512
    %v242 = vsel %vm240, %v237, 0
    %v245 = vsel %vm240, %v238, 0
    %247 = vmatprep.subr.mxu0 0.0
    %248 = vmatpush1.msra.mxu0 %v239
    %249 = vmatprep.subr.mxu0 0.0
    %250 = vmatpush1.msra.mxu0 0.0
    %251 = vmatprep.subr.mxu0 0.0
    %252 = vmatpush1.msra.mxu0 0.0
    %253 = vmatprep.subr.mxu0 0.0
    %254 = vmatpush1.msra.mxu0 0.0
    %255 = vmatprep.subr.mxu0 0.0
    %256 = vmatpush1.msra.mxu0 0.0
    %257 = vmatprep.subr.mxu0 0.0
    %258 = vmatpush1.msra.mxu0 0.0
    %259 = vmatprep.subr.mxu0 0.0
    %260 = vmatpush1.msra.mxu0 0.0
    %261 = vmatprep.subr.mxu0 0.0
    %262 = vmatpush1.msra.mxu0 0.0
    %263 = vmatprep.subr.mxu0 0.0
    %264 = vmatpush1.msra.mxu0 0.0
    %265 = vmatprep.subr.mxu0 0.0
    %266 = vmatpush1.msra.mxu0 0.0
    %267 = vmatprep.subr.mxu0 0.0
    %268 = vmatpush1.msra.mxu0 0.0
    %269 = vmatprep.subr.mxu0 0.0
    %270 = vmatpush1.msra.mxu0 0.0
    %271 = vmatprep.subr.mxu0 0.0
    %272 = vmatpush1.msra.mxu0 0.0
    %273 = vmatprep.subr.mxu0 0.0
    %274 = vmatpush1.msra.mxu0 0.0
    %275 = vmatprep.subr.mxu0 0.0
    %276 = vmatpush1.msra.mxu0 0.0
    %277 = vmatprep.subr.mxu0 0.0
    %278 = vmatpush1.msra.mxu0 0.0
    %279 = vmatprep.subr.mxu0 0.0
    %280 = vmatpush1.msra.mxu0 0.0
    %281 = vmatprep.subr.mxu0 0.0
    %282 = vmatpush1.msra.mxu0 0.0
    %283 = vmatprep.subr.mxu0 0.0
    %284 = vmatpush1.msra.mxu0 0.0
    %285 = vmatprep.subr.mxu0 0.0
    %286 = vmatpush1.msra.mxu0 0.0
    %287 = vmatprep.subr.mxu0 0.0
    %288 = vmatpush1.msra.mxu0 0.0
    %289 = vmatprep.subr.mxu0 0.0
    %290 = vmatpush1.msra.mxu0 0.0
    %291 = vmatprep.subr.mxu0 0.0
    %292 = vmatpush1.msra.mxu0 0.0
    %293 = vmatprep.subr.mxu0 0.0
    %294 = vmatpush1.msra.mxu0 0.0
    %295 = vmatprep.subr.mxu0 0.0
    %296 = vmatpush1.msra.mxu0 0.0
    %297 = vmatprep.subr.mxu0 0.0
    %298 = vmatpush1.msra.mxu0 0.0
    %299 = vmatprep.subr.mxu0 0.0
    %300 = vmatpush1.msra.mxu0 0.0
    %301 = vmatprep.subr.mxu0 0.0
    %302 = vmatpush1.msra.mxu0 0.0
    %303 = vmatprep.subr.mxu0 0.0
    %304 = vmatpush1.msra.mxu0 0.0
    %305 = vmatprep.subr.mxu0 0.0
    %306 = vmatpush1.msra.mxu0 0.0
    %307 = vmatprep.subr.mxu0 0.0
    %308 = vmatpush1.msra.mxu0 0.0
    %309 = vmatprep.subr.mxu0 0.0
    %310 = vmatpush1.msra.mxu0 0.0
    %311 = vmatprep.mubr.f32.mxu0 0.0
    %312 = vmatmul.mubr.f32.gmra.mrb[0].mxu0 %v242
    %v313 = vpop.f32.mrb[0].mxu0
    %v314 = vadd.f32 0.0, %v313
    %v315 = vpop.f32.mrb[0].mxu0
    %316 = vmatprep.mubr.f32.mxu0 0.0
    %317 = vmatmul.mubr.f32.gmra.mrb[0].mxu0 %v245
    %v318 = vpop.f32.mrb[0].mxu0
    %v319 = vadd.f32 0.0, %v318
    %v320 = vpop.f32.mrb[0].mxu0
    %321 = vdwg.mxu0
    %v322 = vmul.f32 %v235, %v314
    %v323 = vmul.f32 %v236, %v319
    %v324 = vld [vmem:[%s7] sm:$0xff]
    %v325 = vld [vmem:[%s7 + $0x8] sm:$0xff]
    %v326 = vld [vmem:[%s7 + $0x10] sm:$0xff]
    %v327 = vld [vmem:[%s7 + $0x18] sm:$0xff]
    %v328 = vld [vmem:[%s7 + $0x20] sm:$0xff]
    %v329 = vld [vmem:[%s7 + $0x28] sm:$0xff]
    %v330 = vld [vmem:[%s7 + $0x30] sm:$0xff]
    %v331 = vld [vmem:[%s7 + $0x38] sm:$0xff]
    %v332 = vld [vmem:[%s7 + $0x40] sm:$0xff]
    %v333 = vld [vmem:[%s7 + $0x48] sm:$0xff]
    %v334 = vld [vmem:[%s7 + $0x50] sm:$0xff]
    %v335 = vld [vmem:[%s7 + $0x58] sm:$0xff]
    %v336 = vld [vmem:[%s7 + $0x60] sm:$0xff]
    %v337 = vld [vmem:[%s7 + $0x68] sm:$0xff]
    %v338 = vld [vmem:[%s7 + $0x70] sm:$0xff]
    %v339 = vld [vmem:[%s7 + $0x78] sm:$0xff]
    %v340 = vld [vmem:[%s8] sm:$0x1]
    %v342 = vlaneseq
    %v343 = vshrl.u32 %v342, 7
    %v344 = vsub.s32 0, %v343
    %v345 = vrot.slane %v340, %v344
    %347 = vmatprep.subr.mxu0 0.0
    %348 = vmatpush1.msra.mxu0 %v324
    %349 = vmatprep.subr.mxu0 0.0
    %350 = vmatpush1.msra.mxu0 %v325
    %351 = vmatprep.subr.mxu0 0.0
    %352 = vmatpush1.msra.mxu0 %v326
    %353 = vmatprep.subr.mxu0 0.0
    %354 = vmatpush1.msra.mxu0 %v327
    %355 = vmatprep.subr.mxu0 0.0
    %356 = vmatpush1.msra.mxu0 %v328
    %357 = vmatprep.subr.mxu0 0.0
    %358 = vmatpush1.msra.mxu0 %v329
    %359 = vmatprep.subr.mxu0 0.0
    %360 = vmatpush1.msra.mxu0 %v330
    %361 = vmatprep.subr.mxu0 0.0
    %362 = vmatpush1.msra.mxu0 %v331
    %363 = vmatprep.subr.mxu0 0.0
    %364 = vmatpush1.msra.mxu0 %v332
    %365 = vmatprep.subr.mxu0 0.0
    %366 = vmatpush1.msra.mxu0 %v333
    %367 = vmatprep.subr.mxu0 0.0
    %368 = vmatpush1.msra.mxu0 %v334
    %369 = vmatprep.subr.mxu0 0.0
    %370 = vmatpush1.msra.mxu0 %v335
    %371 = vmatprep.subr.mxu0 0.0
    %372 = vmatpush1.msra.mxu0 %v336
    %373 = vmatprep.subr.mxu0 0.0
    %374 = vmatpush1.msra.mxu0 %v337
    %375 = vmatprep.subr.mxu0 0.0
    %376 = vmatpush1.msra.mxu0 %v338
    %377 = vmatprep.subr.mxu0 0.0
    %378 = vmatpush1.msra.mxu0 %v339
    %379 = vmatprep.subr.mxu0 0.0
    %380 = vmatpush1.msra.mxu0 0.0
    %381 = vmatprep.subr.mxu0 0.0
    %382 = vmatpush1.msra.mxu0 0.0
    %383 = vmatprep.subr.mxu0 0.0
    %384 = vmatpush1.msra.mxu0 0.0
    %385 = vmatprep.subr.mxu0 0.0
    %386 = vmatpush1.msra.mxu0 0.0
    %387 = vmatprep.subr.mxu0 0.0
    %388 = vmatpush1.msra.mxu0 0.0
    %389 = vmatprep.subr.mxu0 0.0
    %390 = vmatpush1.msra.mxu0 0.0
    %391 = vmatprep.subr.mxu0 0.0
    %392 = vmatpush1.msra.mxu0 0.0
    %393 = vmatprep.subr.mxu0 0.0
    %394 = vmatpush1.msra.mxu0 0.0
    %395 = vmatprep.subr.mxu0 0.0
    %396 = vmatpush1.msra.mxu0 0.0
    %397 = vmatprep.subr.mxu0 0.0
    %398 = vmatpush1.msra.mxu0 0.0
    %399 = vmatprep.subr.mxu0 0.0
    %400 = vmatpush1.msra.mxu0 0.0
    %401 = vmatprep.subr.mxu0 0.0
    %402 = vmatpush1.msra.mxu0 0.0
    %403 = vmatprep.subr.mxu0 0.0
    %404 = vmatpush1.msra.mxu0 0.0
    %405 = vmatprep.subr.mxu0 0.0
    %406 = vmatpush1.msra.mxu0 0.0
    %407 = vmatprep.subr.mxu0 0.0
    %408 = vmatpush1.msra.mxu0 0.0
    %409 = vmatprep.subr.mxu0 0.0
    %410 = vmatpush1.msra.mxu0 0.0
    %411 = vmatprep.mubr.f32.mxu0 0.0
    %412 = vmatmul.mubr.f32.gmra.mrb[0].mxu0 %v322
    %v413 = vpop.f32.mrb[0].mxu0
    %v414 = vadd.f32 %v345, %v413
    %v415 = vpop.f32.mrb[0].mxu0
    %416 = vmatprep.mubr.f32.mxu0 0.0
    %417 = vmatmul.mubr.f32.gmra.mrb[0].mxu0 %v323
    %v418 = vpop.f32.mrb[0].mxu0
    %v419 = vadd.f32 %v345, %v418
    %v420 = vpop.f32.mrb[0].mxu0
    %421 = vdwg.mxu0
    %v422 = vmax.f32 %v414, 0.0
    %v423 = vmax.f32 %v419, 0.0
    %v424 = vld [vmem:[%s9] sm:$0x1]
    %v425 = vld [vmem:[#allocation2] sm:$0x1]
    %427 = vset.pattern.permute.xlu0 0
    %428 = vperm.xlu0 %427, %v425
    %v429 = vpop.permute.xlu0 %428
    %v431 = vlaneseq
    %v432 = vshrl.u32 %v431, 7
    %v433 = vsub.s32 0, %v432
    %v434 = vrot.slane %v429, %v433
    %vm435 = vcmask 261120
    %v437 = vsel %vm435, %v424, 0
    %v440 = vsel %vm435, %v422, 0
    %v443 = vsel %vm435, %v423, 0
    %445 = vmatprep.subr.mxu0 0.0
    %446 = vmatpush1.xpose.msra.mxu0 %v440
    %447 = vmatprep.subr.mxu0 0.0
    %448 = vmatpush1.xpose.msra.mxu0 %v443
    %449 = vmatprep.subr.mxu0 0.0
    %450 = vmatpush1.xpose.msra.mxu0 0.0
    %451 = vmatprep.subr.mxu0 0.0
    %452 = vmatpush1.xpose.msra.mxu0 0.0
    %453 = vmatprep.subr.mxu0 0.0
    %454 = vmatpush1.xpose.msra.mxu0 0.0
    %455 = vmatprep.subr.mxu0 0.0
    %456 = vmatpush1.xpose.msra.mxu0 0.0
    %457 = vmatprep.subr.mxu0 0.0
    %458 = vmatpush1.xpose.msra.mxu0 0.0
    %459 = vmatprep.subr.mxu0 0.0
    %460 = vmatpush1.xpose.msra.mxu0 0.0
    %461 = vmatprep.subr.mxu0 0.0
    %462 = vmatpush1.xpose.msra.mxu0 0.0
    %463 = vmatprep.subr.mxu0 0.0
    %464 = vmatpush1.xpose.msra.mxu0 0.0
    %465 = vmatprep.subr.mxu0 0.0
    %466 = vmatpush1.xpose.msra.mxu0 0.0
    %467 = vmatprep.subr.mxu0 0.0
    %468 = vmatpush1.xpose.msra.mxu0 0.0
    %469 = vmatprep.subr.mxu0 0.0
    %470 = vmatpush1.xpose.msra.mxu0 0.0
    %471 = vmatprep.subr.mxu0 0.0
    %472 = vmatpush1.xpose.msra.mxu0 0.0
    %473 = vmatprep.subr.mxu0 0.0
    %474 = vmatpush1.xpose.msra.mxu0 0.0
    %475 = vmatprep.subr.mxu0 0.0
    %476 = vmatpush1.xpose.msra.mxu0 0.0
    %477 = vmatprep.subr.mxu0 0.0
    %478 = vmatpush1.xpose.msra.mxu0 0.0
    %479 = vmatprep.subr.mxu0 0.0
    %480 = vmatpush1.xpose.msra.mxu0 0.0
    %481 = vmatprep.subr.mxu0 0.0
    %482 = vmatpush1.xpose.msra.mxu0 0.0
    %483 = vmatprep.subr.mxu0 0.0
    %484 = vmatpush1.xpose.msra.mxu0 0.0
    %485 = vmatprep.subr.mxu0 0.0
    %486 = vmatpush1.xpose.msra.mxu0 0.0
    %487 = vmatprep.subr.mxu0 0.0
    %488 = vmatpush1.xpose.msra.mxu0 0.0
    %489 = vmatprep.subr.mxu0 0.0
    %490 = vmatpush1.xpose.msra.mxu0 0.0
    %491 = vmatprep.subr.mxu0 0.0
    %492 = vmatpush1.xpose.msra.mxu0 0.0
    %493 = vmatprep.subr.mxu0 0.0
    %494 = vmatpush1.xpose.msra.mxu0 0.0
    %495 = vmatprep.subr.mxu0 0.0
    %496 = vmatpush1.xpose.msra.mxu0 0.0
    %497 = vmatprep.subr.mxu0 0.0
    %498 = vmatpush1.xpose.msra.mxu0 0.0
    %499 = vmatprep.subr.mxu0 0.0
    %500 = vmatpush1.xpose.msra.mxu0 0.0
    %501 = vmatprep.subr.mxu0 0.0
    %502 = vmatpush1.xpose.msra.mxu0 0.0
    %503 = vmatprep.subr.mxu0 0.0
    %504 = vmatpush1.xpose.msra.mxu0 0.0
    %505 = vmatprep.subr.mxu0 0.0
    %506 = vmatpush1.xpose.msra.mxu0 0.0
    %507 = vmatprep.subr.mxu0 0.0
    %508 = vmatpush1.xpose.msra.mxu0 0.0
    %509 = vmatprep.mubr.f32.mxu0 0.0
    %510 = vmatmul.mubr.f32.gmra.mrb[0].mxu0 %v437
    %v511 = vpop.f32.mrb[0].mxu0
    %v512 = vadd.f32 %v434, %v511
    %v513 = vpop.f32.mrb[0].mxu0
    %514 = vdwg.mxu0
    %v515 = vxor.u32 %v512, 2147483648
    %v516 = vmul.f32 %v515, 1.442695
    %v517 = vpow.pop %v516
    %v518 = vadd.f32 %v517, 1.0
    %v519 = vrcp.pop %v518
    %v520 = vmul.f32 1.0, %v519
    %vm521 = vcmask 122880
    %522 = vst.msk [vmem:[#allocation3] sm:$0x1] %vm521, %v520
    // Predicated region
    $region46: #{tpu_custom_call.1} parent=1 // pred_check
      _
    $region47: #{tpu_custom_call.1} parent=1 // pred_check_branch
      %524 = sbr.rel (0) target = $region49
    $region48: #{tpu_custom_call.1} parent=1 // pred_region
      %s526 = ssub.s32 16, 16
      %527 = vsyncadd [#allocation4], %s526
      %s529 = sshll.u32 [#allocation3], 4
      %s530 = int_to_ptr.vmem [resolvable:$true] %s529
      %532 = dma.vmem_to_hbm [thread:$0]  %s530, 16, %s11, [#allocation4]
    $region49: #{tpu_custom_call.1} parent=1 // pred_fallthru
      _
    // Predicated region
    $region50: #{tpu_custom_call.1} parent=1 // pred_check
      _
    $region51: #{tpu_custom_call.1} parent=1 // pred_check_branch
      %534 = sbr.rel (0) target = $region53
    $region52: #{tpu_custom_call.1} parent=1 // pred_region
      %535 = dma.done [#allocation4], 16
    $region53: #{tpu_custom_call.1} parent=1 // pred_fallthru
      _
    %536 = vsyncpa [#allocation4], 1

</llo_original>
